<compile_context>
chip_gen: v7x
topology: tpu7x:2x2x1
jax: 0.10.0
libtpu: 0.0.40
codegen_flags: <defaults>
</compile_context>

<pallas_src>
import math
import functools

import jax
import jax.numpy as jnp
from jax import lax
from jax.experimental import pallas as pl
from jax.experimental.pallas import tpu as pltpu


def posenc_dropout_kernel(seed_ref, x_ref, pe_ref, o_ref, *,
                          dropout_p, train, block_b, block_f, total_c):
    # x_ref/o_ref: (block_b, block_f) lane-dense tile of the folded (R, C)
    # embedding; pe_ref: (block_b, block_f) matching pre-tiled pe block.
    y = x_ref[...] + pe_ref[...]

    if train and dropout_p > 0.0:
        if dropout_p >= 1.0:
            y = jnp.zeros_like(y)
        else:
            # Counter-based hash dropout, cheap 2-step mix (xor-mul, xor-shift).
            # Deterministic & tiling-invariant: depends only on (seed, element).
            # NOTE: element ids are computed mod 2^32 -> tensors beyond 2^32
            # elements would see correlated masks.
            base = (pl.program_id(1) * (block_b * total_c)
                    + pl.program_id(0) * block_f).astype(jnp.uint32)
            rows = lax.broadcasted_iota(jnp.int32, y.shape, 0).astype(jnp.uint32)
            cols = lax.broadcasted_iota(jnp.int32, y.shape, 1).astype(jnp.uint32)
            idx = rows * jnp.uint32(total_c) + cols + base

            seed = seed_ref[0].astype(jnp.uint32) * jnp.uint32(0x9E3779B9)
            h = (idx ^ seed) * jnp.uint32(0x9E3779B1)
            h = h ^ lax.shift_right_logical(h, jnp.uint32(16))

            # Drop w.p. p  <=>  h < round(p * 2^32)  (pure integer compare).
            threshold = jnp.uint32(
                min(int(round(dropout_p * (1 << 32))), (1 << 32) - 1))
            scale = 1.0 / (1.0 - dropout_p)
            # Single select feeding a single multiply.
            mult = jnp.where(h >= threshold,
                             jnp.asarray(scale, y.dtype),
                             jnp.asarray(0.0, y.dtype))
            y = y * mult

    o_ref[...] = y.astype(o_ref.dtype)


def make_pos_encoding(max_len: int, dim_model: int) -> jnp.ndarray:
    """Deterministic sin/cos table, same math as the PyTorch __init__."""
    positions = jnp.arange(max_len, dtype=jnp.float32)[:, None]           # (L, 1)
    division_term = jnp.exp(
        jnp.arange(0, dim_model, 2, dtype=jnp.float32)
        * (-math.log(10000.0) / dim_model)
    )                                                                      # (D/2,)
    pe = jnp.zeros((max_len, dim_model), jnp.float32)
    pe = pe.at[:, 0::2].set(jnp.sin(positions * division_term))
    pe = pe.at[:, 1::2].set(jnp.cos(positions * division_term))
    return pe


def _divisors(n):
    ds = set()
    i = 1
    while i * i <= n:
        if n % i == 0:
            ds.add(i)
            ds.add(n // i)
        i += 1
    return ds


def _choose_row_fold(B, F):
    """Fold factor k: view (B, F) as (B*k, F//k) so the row axis fills the 8
    sublanes of every vreg while the lane axis stays a multiple of 128."""
    if B % 8 == 0:
        return 1
    best = 1
    for k in (8, 4, 2):
        if F % k == 0 and (F // k) % 128 == 0:
            if (B * k) % 8 == 0:
                return k
            if best == 1 and B * k >= 8:
                best = k
    return best


def _choose_blocks(R, C, k, itemsize,
                   max_block_bytes=4 * 1024 * 1024,
                   min_block_bytes=1 * 1024 * 1024):
    """Pick (tB, tF) jointly under a ~4 MiB per-buffer budget.

    x/out/pe are each double-buffered -> ~6 tiles <= 24 MiB, inside the 32 MiB
    scoped-VMEM limit and well under v7x's 64 MiB physical VMEM.  Divisor
    search (not power-of-2 halving) keeps non-power-of-2 shapes legal."""
    max_elems = max(8 * 128, max_block_bytes // itemsize)

    if C % 128 == 0:
        tf_cands = sorted((d for d in _divisors(C) if d % 128 == 0), reverse=True)
    else:
        tf_cands = [C]               # non-128 last dim must be full extent
    if R % 8 == 0:
        tb_cands = sorted((d for d in _divisors(R) if d % 8 == 0), reverse=True)
    else:
        tb_cands = [R]               # non-8 sublane dim must be full extent

    best = None
    for tB in tb_cands:
        for tF in tf_cands:
            if tB * tF <= max_elems:
                if best is None or tB * tF > best[0] * best[1]:
                    best = (tB, tF)
                break                # descending: first fit is largest for this tB
    if best is None:                 # nothing fits the budget; smallest legal tile
        best = (tb_cands[-1], tf_cands[-1])
    tB, tF = best

    # Megacore (v7x): prefer >= 2 blocks on a "parallel" axis as long as each
    # tile stays >= ~1 MiB, so both TensorCores get work.
    if (R // tB) * (C // tF) < 2:
        for cand in tf_cands:
            if cand < tF and C // cand >= 2 and tB * cand * itemsize >= min_block_bytes:
                tF = cand
                break
        else:
            for cand in tb_cands:
                if cand < tB and R // cand >= 2 and cand * tF * itemsize >= min_block_bytes:
                    tB = cand
                    break
    return tB, tF


def positional_encoding_forward(x, pos_encoding, *, dropout_p, train, seed=0):
    B, S, D = x.shape
    assert pos_encoding.shape == (S, D), "seq_len must equal max_len (as in torch)"
    F = S * D

    k = _choose_row_fold(B, F)
    R, C = B * k, F // k
    xf = x.reshape(R, C)                                  # lane-dense folded layout

    tB, tF = _choose_blocks(R, C, k, x.dtype.itemsize)
    assert tB % k == 0 and R % tB == 0 and C % tF == 0

    # Pre-tile the (small) pe table to exactly one (tB, C) block; cast once.
    pe_block = jnp.tile(pos_encoding.astype(x.dtype).reshape(k, C), (tB // k, 1))

    grid = (C // tF, R // tB)   # lane axis outer, row axis inner -> pe resident

    kernel = functools.partial(
        posenc_dropout_kernel,
        dropout_p=float(dropout_p), train=bool(train),
        block_b=tB, block_f=tF, total_c=C,
    )

    out = pl.pallas_call(
        kernel,
        out_shape=jax.ShapeDtypeStruct((R, C), x.dtype),
        grid_spec=pltpu.PrefetchScalarGridSpec(
            num_scalar_prefetch=1,                        # seed lands in SMEM
            grid=grid,
            in_specs=[
                pl.BlockSpec((tB, tF), lambda f, b, seed_ref: (b, f)),
                pl.BlockSpec((tB, tF), lambda f, b, seed_ref: (0, f)),
            ],
            out_specs=pl.BlockSpec((tB, tF), lambda f, b, seed_ref: (b, f)),
        ),
        compiler_params=pltpu.CompilerParams(
            dimension_semantics=("parallel", "parallel"),
            vmem_limit_bytes=32 * 1024 * 1024,
        ),
    )(jnp.asarray([seed], jnp.int32), xf, pe_block)

    return out.reshape(B, S, D)


if __name__ == "__main__":
    # Module hyper-parameters (synthetic, deterministic).
    dim_model = 32
    max_len = 16
    dropout_p = 0.1
    B = 2
    seed = 1234

    key = jax.random.PRNGKey(0)
    x = jax.random.normal(key, (B, max_len, dim_model), dtype=jnp.float32)
    pe = make_pos_encoding(max_len, dim_model)
    ref = x + pe[None, :, :]

    # Eval mode (dropout is identity): must match x + pe.
    out_eval = jax.block_until_ready(
        positional_encoding_forward(x, pe, dropout_p=dropout_p, train=False))
    assert out_eval.shape == (B, max_len, dim_model)
    assert jnp.allclose(out_eval, ref, atol=1e-6), "eval-mode mismatch"

    # Train mode: in-kernel deterministic dropout. Recompute the exact expected
    # mask host-side with the same hash and verify the full output.
    out_train = jax.block_until_ready(
        positional_encoding_forward(x, pe, dropout_p=dropout_p, train=True, seed=seed))
    assert out_train.shape == (B, max_len, dim_model)

    n = B * max_len * dim_model
    idx = jnp.arange(n, dtype=jnp.uint32)
    seed_mix = jnp.asarray(seed, jnp.uint32) * jnp.asarray(0x9E3779B9, jnp.uint32)
    h = (idx ^ seed_mix) * jnp.asarray(0x9E3779B1, jnp.uint32)
    h = h ^ (h >> 16)
    threshold = jnp.asarray(min(int(round(dropout_p * (1 << 32))), (1 << 32) - 1),
                            jnp.uint32)
    keep = (h >= threshold).reshape(B, max_len, dim_model)
    expected_train = jnp.where(keep, ref * jnp.float32(1.0 / (1.0 - dropout_p)), 0.0)
    assert jnp.allclose(out_train, expected_train, atol=1e-5), \
        "train-mode dropout mismatch"

    drop_frac = 1.0 - float(jnp.mean(keep.astype(jnp.float32)))
    assert 0.0 <= drop_frac < 0.5, "dropout rate implausible"

    print("KERNEL_OK")
</pallas_src>

<mosaic_0001>
module attributes {stable_mosaic.version = 11 : i64} {
  func.func @posenc_dropout_kernel(%arg0: i32, %arg1: i32, %arg2: memref<1xi32, #tpu.memory_space<smem>>, %arg3: memref<8x128xf32, #tpu.memory_space<vmem>>, %arg4: memref<8x128xf32, #tpu.memory_space<vmem>>, %arg5: memref<8x128xf32, #tpu.memory_space<vmem>>) attributes {dimension_semantics = [#tpu.dimension_semantics<parallel>, #tpu.dimension_semantics<parallel>], iteration_bounds = array<i64: 1, 1>, scalar_prefetch = 1 : i64, scratch_operands = 0 : i64, tpu.core_type = #tpu.core_type<tc>, window_params = [{transform_indices = @transform_0, window_bounds = array<i64: 8, 128>}, {transform_indices = @transform_1, window_bounds = array<i64: 8, 128>}, {transform_indices = @transform_2, window_bounds = array<i64: 8, 128>}]} {
    %c0 = arith.constant 0 : index
    %c0_0 = arith.constant 0 : index
    %0 = vector.load %arg3[%c0, %c0_0] : memref<8x128xf32, #tpu.memory_space<vmem>>, vector<8x128xf32>
    %c0_1 = arith.constant 0 : index
    %c0_2 = arith.constant 0 : index
    %1 = vector.load %arg4[%c0_1, %c0_2] : memref<8x128xf32, #tpu.memory_space<vmem>>, vector<8x128xf32>
    %2 = arith.addf %0, %1 : vector<8x128xf32>
    %c0_3 = arith.constant 0 : index
    %c0_4 = arith.constant 0 : index
    %3 = vector.load %arg5[%c0_3, %c0_4] : memref<8x128xf32, #tpu.memory_space<vmem>>, vector<8x128xf32>
    tpu.vector_store %arg5[%c0_3, %c0_4], %2 {strides = array<i32>} : memref<8x128xf32, #tpu.memory_space<vmem>>, vector<8x128xf32>,
    return
  }
  func.func @transform_0(%arg0: i32, %arg1: i32, %arg2: memref<1xi32, #tpu.memory_space<smem>>) -> (i32, i32) {
    %c0_i32 = arith.constant 0 : i32
    return %arg1, %arg0 : i32, i32
  }
  func.func @transform_1(%arg0: i32, %arg1: i32, %arg2: memref<1xi32, #tpu.memory_space<smem>>) -> (i32, i32) {
    %c0_i32 = arith.constant 0 : i32
    %c0_i32_0 = arith.constant 0 : i32
    return %c0_i32, %arg0 : i32, i32
  }
  func.func @transform_2(%arg0: i32, %arg1: i32, %arg2: memref<1xi32, #tpu.memory_space<smem>>) -> (i32, i32) {
    %c0_i32 = arith.constant 0 : i32
    return %arg1, %arg0 : i32, i32
  }
}

</mosaic_0001>

<llo_original>
// kernel: tpu_custom_call.1
$region0: #{tpu_custom_call.1}
  #allocation0 [shape = 'u32[]', space=smem, size = 0x4, offset = 0x4, fixed_abs, tag = 'smem constant byte address 0x4 - core index']
  #allocation1 [shape = 'u32[144,128]{1,0:T(1,128)}', space=vmem, size = 0x12000, scoped, tag = 'internal scratch']
  #allocation2 [shape = 's32[1]{0}', space=sflag, size = 0x4, scoped, tag = 'scoped memory for tpu_custom_call.1']
  #allocation3 [shape = 's32[1]{0:T(128)S(6)}', space=smem, size = 0x200, scoped, tag = 'prefetched SMEM operand 0']
  %s0 = inlined_call_operand.<no memory space> [shape: s32[1], index: 0, kind: input, shape index: {}]
  %s1 = inlined_call_operand.hbm [shape: f32[8,128], index: 1, kind: input, shape index: {}]
  %s2 = inlined_call_operand.hbm [shape: f32[8,128], index: 2, kind: input, shape index: {}]
  %s3 = inlined_call_operand.hbm [shape: f32[8,128], index: 3, kind: output, shape index: {}]
  %s4 = sld [smem:[#allocation0]]
  $region26: #{tpu_custom_call.1} parent=0
    _
  %s6 = ssub.s32 1, %s4
  %s7 = scalar_select 0, %s6, %s4
  %8 = sst [smem:[#allocation3]] %s0
  $region1: #{tpu_custom_call.1} parent=0
    #allocation4 [shape = 'u8[4096]{0}', space=vmem, size = 0x1000, scoped, tag = 'input window, operand 1, single buffered']
    #allocation5 [shape = 's32[1]{0}', space=sflag, size = 0x4, scoped, tag = 'scoped memory for tpu_custom_call.1']
    #allocation6 [shape = 's32[1]{0}', space=sflag, size = 0x4, scoped, tag = 'scoped memory for tpu_custom_call.1']
    #allocation7 [shape = 'u8[4096]{0}', space=vmem, size = 0x1000, scoped, tag = 'input window, operand 2, single buffered']
    #allocation8 [shape = 's32[1]{0}', space=sflag, size = 0x4, scoped, tag = 'scoped memory for tpu_custom_call.1']
    #allocation9 [shape = 'u8[4096]{0}', space=vmem, size = 0x1000, scoped, tag = 'output window, operand 0, single buffered']
    %9 = vsyncpa [#allocation5], 0
    %10 = vsyncpa [#allocation8], 0
    %11 = vsyncpa [#allocation6], 0
    // Predicated region
    $region2: #{tpu_custom_call.1} parent=1 // pred_check
      _
    $region3: #{tpu_custom_call.1} parent=1 // pred_check_branch
      %13 = sbr.rel (0) target = $region5
    $region4: #{tpu_custom_call.1} parent=1 // pred_region
      %s15 = ssub.s32 128, 128
      %16 = vsyncadd [#allocation5], %s15
      %s18 = sshll.u32 [#allocation4], 4
      %s19 = int_to_ptr.vmem [resolvable:$true] %s18
      %21 = dma.hbm_to_vmem [thread:$0]  %s1, 128, %s19, [#allocation5]
    $region5: #{tpu_custom_call.1} parent=1 // pred_fallthru
      _
    // Predicated region
    $region6: #{tpu_custom_call.1} parent=1 // pred_check
      _
    $region7: #{tpu_custom_call.1} parent=1 // pred_check_branch
      %23 = sbr.rel (0) target = $region9
    $region8: #{tpu_custom_call.1} parent=1 // pred_region
      %s25 = ssub.s32 128, 128
      %26 = vsyncadd [#allocation8], %s25
      %s28 = sshll.u32 [#allocation7], 4
      %s29 = int_to_ptr.vmem [resolvable:$true] %s28
      %31 = dma.hbm_to_vmem [thread:$0]  %s2, 128, %s29, [#allocation8]
    $region9: #{tpu_custom_call.1} parent=1 // pred_fallthru
      _
    // Predicated region
    $region10: #{tpu_custom_call.1} parent=1 // pred_check
      _
    $region11: #{tpu_custom_call.1} parent=1 // pred_check_branch
      %33 = sbr.rel (0) target = $region13
    $region12: #{tpu_custom_call.1} parent=1 // pred_region
      %34 = dma.done [#allocation5], 128
    $region13: #{tpu_custom_call.1} parent=1 // pred_fallthru
      _
    // Predicated region
    $region14: #{tpu_custom_call.1} parent=1 // pred_check
      _
    $region15: #{tpu_custom_call.1} parent=1 // pred_check_branch
      %36 = sbr.rel (0) target = $region17
    $region16: #{tpu_custom_call.1} parent=1 // pred_region
      %37 = dma.done [#allocation8], 128
    $region17: #{tpu_custom_call.1} parent=1 // pred_fallthru
      _
    %v38 = vld [vmem:[#allocation4] sm:$0xff]
    %v39 = vld [vmem:[#allocation7] sm:$0xff]
    %v40 = vadd.f32 %v38, %v39
    %41 = vst [vmem:[#allocation9] sm:$0xff] %v40
    // Predicated region
    $region18: #{tpu_custom_call.1} parent=1 // pred_check
      _
    $region19: #{tpu_custom_call.1} parent=1 // pred_check_branch
      %43 = sbr.rel (0) target = $region21
    $region20: #{tpu_custom_call.1} parent=1 // pred_region
      %s45 = ssub.s32 128, 128
      %46 = vsyncadd [#allocation6], %s45
      %s48 = sshll.u32 [#allocation9], 4
      %s49 = int_to_ptr.vmem [resolvable:$true] %s48
      %51 = dma.vmem_to_hbm [thread:$0]  %s49, 128, %s3, [#allocation6]
    $region21: #{tpu_custom_call.1} parent=1 // pred_fallthru
      _
    // Predicated region
    $region22: #{tpu_custom_call.1} parent=1 // pred_check
      _
    $region23: #{tpu_custom_call.1} parent=1 // pred_check_branch
      %53 = sbr.rel (0) target = $region25
    $region24: #{tpu_custom_call.1} parent=1 // pred_region
      %54 = dma.done [#allocation6], 128
    $region25: #{tpu_custom_call.1} parent=1 // pred_fallthru
      _
    %55 = vsyncpa [#allocation5], 1
    %56 = vsyncpa [#allocation8], 1
    %57 = vsyncpa [#allocation6], 1

</llo_original>
